<compile_context>
chip_gen: v6e
topology: v6e:2x2x1
jax: 0.10.0
libtpu: 0.0.40
codegen_flags: <defaults>
</compile_context>

<pallas_src>
import functools

import jax
import jax.numpy as jnp
from jax.experimental import pallas as pl
from jax.experimental.pallas import tpu as pltpu

LAMBDA_GP = 10.0


def _round_up(x, m):
    return ((x + m - 1) // m) * m


def _cdiv(a, b):
    return -(-a // b)


def _wgan_gp_kernel(alpha_ref, real_ref, fake_ref, aux_ref, w1_ref, gram_ref,
                    w2t_ref, pen_ref, pre_acc, *, interp_bf16, f_valid):
    """Grid = (B tiles, F tiles).  F axis reduces into the pre_acc scratch."""
    k = pl.program_id(1)

    @pl.when(k == 0)
    def _():
        # pre-activation starts from the hoisted aux bias  v@Wv + a@Wa + b1
        pre_acc[...] = aux_ref[...]

    # interpolates = fake + alpha * (real - fake)
    if interp_bf16:
        rb = real_ref[...].astype(jnp.bfloat16)
        fb = fake_ref[...].astype(jnp.bfloat16)
        al = alpha_ref[...].astype(jnp.bfloat16)          # [tb, 1]
        x = fb + al * (rb - fb)                           # [tb, tf] bf16
    else:
        rr = real_ref[...].astype(jnp.float32)
        ff = fake_ref[...].astype(jnp.float32)
        x = (ff + alpha_ref[...] * (rr - ff)).astype(jnp.bfloat16)

    # Ragged F edge: zero out columns >= F (garbage in the last partial tile).
    if f_valid is not None:
        tf_blk = x.shape[1]
        col = jax.lax.broadcasted_iota(jnp.int32, x.shape, 1) + k * tf_blk
        x = jnp.where(col < f_valid, x, jnp.zeros_like(x))

    # accumulate x @ W1 over F tiles (bf16 MXU feed, f32 accumulation)
    pre_acc[...] += jnp.dot(x, w1_ref[...], preferred_element_type=jnp.float32)

    @pl.when(k == pl.num_programs(1) - 1)
    def _():
        h = jnp.tanh(pre_acc[...])                         # [tb, Hd_p]
        # analytic grad: g = s @ W1^T with s = (1 - h^2) * w2^T.
        # Gram trick: ||g||^2 = s^T (W1^T W1) s — [tb, F] grad never built.
        s = (1.0 - h * h) * w2t_ref[...]                   # [tb, Hd_p]
        sG = jnp.dot(s, gram_ref[...], preferred_element_type=jnp.float32)
        sq = jnp.maximum(jnp.sum(sG * s, axis=1, keepdims=True), 0.0)
        norms = jnp.sqrt(sq)                               # [tb, 1]
        pen_ref[...] = (norms - 1.0) ** 2


def _device_kind():
    try:
        return jax.devices()[0].device_kind.lower()
    except Exception:  # pragma: no cover
        return ""


def wgan_gp_loss(real_imgs, fake_imgs, v, a, params, alpha,
                 lambda_gp=LAMBDA_GP, tf=2048, tb=None):
    """Returns scalar gradient penalty.  real/fake are NCHW (any float dtype)."""
    B = real_imgs.shape[0]
    F = 1
    for d in real_imgs.shape[1:]:
        F *= int(d)
    w1, wv, wa, b1, w2 = params
    Hd = w1.shape[1]
    f32, bf16 = jnp.float32, jnp.bfloat16

    kind = _device_kind()
    is_v5 = "v5" in kind
    is_v7 = "v7" in kind
    interp_bf16 = not is_v5      # bf16 VPU exists on v6e/v7x; keep f32 VALU on v5

    # ---- tile / pad sizes ---------------------------------------------------
    Hd_p = _round_up(max(Hd, 128), 128)
    tf = _round_up(min(tf, _round_up(F, 128)), 128)
    if tb is None:
        if B >= 1024:
            tb = 512
        elif B >= 512:
            tb = 256
        elif B >= 256:
            tb = 128
        else:
            # small/medium batch: aim for >= 2 B blocks so megacore is used
            tb = max(16, _round_up(_cdiv(B, 2), 16))

    in_bytes = jnp.dtype(real_imgs.dtype).itemsize

    # Per-generation VMEM budgeting (v7x has only 64 MiB physical VMEM).
    tile_budget = (40 << 20) if is_v7 else (80 << 20)

    def footprint(tb_, tf_):
        return (2 * (2 * tb_ * tf_ * in_bytes       # real + fake tiles (dbl buf)
                     + tf_ * Hd_p * 2               # W1 tile (bf16)
                     + tb_ * Hd_p * 4               # aux tile
                     + Hd_p * Hd_p * 4 + Hd_p * 4   # gram + w2^T
                     + tb_ * 4 + tb_ * 4)           # alpha + pen
                + tb_ * Hd_p * 4)                   # pre_acc scratch

    while footprint(tb, tf) > tile_budget and tf > 512:
        tf = _round_up(max(512, tf // 2), 128)
    while footprint(tb, tf) > tile_budget and tb > 16:
        tb = _round_up(max(16, tb // 2), 16)

    nb, nf = _cdiv(B, tb), _cdiv(F, tf)
    B_cov, F_cov = nb * tb, nf * tf
    vmem_limit = int(min((56 << 20) if is_v7 else (112 << 20),
                         max(footprint(tb, tf) + (16 << 20), 32 << 20)))

    # ---- inputs: dominant arrays go in raw (no cast/pad HBM round trip) -----
    real_f = real_imgs.reshape(B, F)
    fake_f = fake_imgs.reshape(B, F)
    alpha2 = alpha.reshape(B, 1).astype(f32)

    # hoisted aux bias:  v @ Wv + a @ Wa + b1     [B, Hd] -> [B, Hd_p]
    aux = (v.astype(f32) @ wv.astype(f32)
           + a.astype(f32) @ wa.astype(f32) + b1.astype(f32))
    aux_p = jnp.pad(aux, ((0, 0), (0, Hd_p - Hd)))

    # W1: bf16 MXU feed padded with exact zeros on both axes.
    w1_bf = jnp.pad(w1.astype(bf16), ((0, F_cov - F), (0, Hd_p - Hd)))
    # Gram matrix (f32, HIGHEST precision) from the *unpadded* W1.
    # TODO(synk): for Hd_p >~ B the wrapper-side Gram (2*F*Hd^2 flops) dominates;
    # in that regime accumulate ||g||^2 per F-tile inside the kernel instead.
    w1_f = w1.astype(f32)
    gram = jnp.pad(jnp.matmul(w1_f.T, w1_f,
                              precision=jax.lax.Precision.HIGHEST),
                   ((0, Hd_p - Hd), (0, Hd_p - Hd)))
    w2t_p = jnp.pad(w2.astype(f32).reshape(1, Hd), ((0, 0), (0, Hd_p - Hd)))

    cost = pl.CostEstimate(
        flops=int(2 * B_cov * F_cov * Hd_p + 2 * B_cov * Hd_p * Hd_p
                  + 5 * B_cov * F_cov),
        transcendentals=int(B_cov * Hd_p),
        bytes_accessed=int(2 * B_cov * F_cov * in_bytes   # real + fake
                           + nb * F_cov * Hd_p * 2        # W1 re-streamed per B tile
                           + B_cov * Hd_p * 4             # aux (once per B tile)
                           + Hd_p * Hd_p * 4 + Hd_p * 4   # gram + w2^T
                           + B_cov * 4 + B * 4),          # alpha + pen
    )

    kernel = functools.partial(
        _wgan_gp_kernel,
        interp_bf16=interp_bf16,
        f_valid=(F if (F % tf != 0) else None))

    pen = pl.pallas_call(
        kernel,
        out_shape=jax.ShapeDtypeStruct((B, 1), f32),
        grid_spec=pltpu.PrefetchScalarGridSpec(
            num_scalar_prefetch=0,
            grid=(nb, nf),
            in_specs=[
                pl.BlockSpec((tb, 1), lambda i, k: (i, 0)),        # alpha
                pl.BlockSpec((tb, tf), lambda i, k: (i, k)),       # real (raw)
                pl.BlockSpec((tb, tf), lambda i, k: (i, k)),       # fake (raw)
                pl.BlockSpec((tb, Hd_p), lambda i, k: (i, 0)),     # aux bias
                pl.BlockSpec((tf, Hd_p), lambda i, k: (k, 0)),     # W1 (bf16)
                pl.BlockSpec((Hd_p, Hd_p), lambda i, k: (0, 0)),   # Gram
                pl.BlockSpec((1, Hd_p), lambda i, k: (0, 0)),      # w2^T
            ],
            out_specs=pl.BlockSpec((tb, 1), lambda i, k: (i, 0)),
            scratch_shapes=[pltpu.VMEM((tb, Hd_p), f32)],
        ),
        compiler_params=pltpu.CompilerParams(
            dimension_semantics=("parallel", "arbitrary"),
            vmem_limit_bytes=vmem_limit),
        cost_estimate=cost,
    )(alpha2, real_f, fake_f, aux_p, w1_bf, gram, w2t_p)

    # only the B real rows are valid (partial-block rows are skipped/garbage)
    return jnp.mean(pen[:, 0]) * lambda_gp


# ----- pure-JAX reference (uses autodiff, mirrors torch.autograd.grad) -----
def _d_apply(x_flat, v, a, params):
    w1, wv, wa, b1, w2 = params
    h = jnp.tanh(x_flat @ w1 + v @ wv + a @ wa + b1)
    return h @ w2, h


def reference_gp(real_imgs, fake_imgs, v, a, params, alpha, lambda_gp=LAMBDA_GP):
    B = real_imgs.shape[0]
    rf = real_imgs.reshape(B, -1)
    ff = fake_imgs.reshape(B, -1)
    x = alpha * rf + (1.0 - alpha) * ff

    def d_sum(xx):
        d, _ = _d_apply(xx, v, a, params)
        return jnp.sum(d)  # grad_outputs = ones_like(d)

    g = jax.grad(d_sum)(x)
    norms = jnp.sqrt(jnp.sum(g * g, axis=1))
    return jnp.mean((norms - 1.0) ** 2) * lambda_gp


if __name__ == "__main__":
    key = jax.random.PRNGKey(0)
    B, C, H, W = 2, 4, 16, 16          # real_imgs / fake_imgs: NCHW
    Dv, Da, Hd = 8, 8, 32              # aux-input widths, discriminator hidden

    ks = jax.random.split(key, 9)
    real = jax.random.normal(ks[0], (B, C, H, W), jnp.float32)
    fake = jax.random.normal(ks[1], (B, C, H, W), jnp.float32)
    v = jax.random.normal(ks[2], (B, Dv), jnp.float32)
    a = jax.random.normal(ks[3], (B, Da), jnp.float32)

    Fdim = C * H * W
    # TODO(synk): the PyTorch module accepts an arbitrary discriminator D; an
    # arbitrary nn.Module cannot be passed into a Pallas kernel, so a fixed
    # tanh-MLP discriminator with a closed-form input gradient is used.
    w1 = jax.random.normal(ks[4], (Fdim, Hd), jnp.float32) * 0.02
    wv = jax.random.normal(ks[5], (Dv, Hd), jnp.float32) * 0.02
    wa = jax.random.normal(ks[6], (Da, Hd), jnp.float32) * 0.02
    b1 = jnp.zeros((1, Hd), jnp.float32)
    w2 = jax.random.normal(ks[7], (Hd, 1), jnp.float32) * 0.02
    params = (w1, wv, wa, b1, w2)

    # alpha ~ U[0,1) per sample (torch.rand(B,1,1,1) equivalent, flattened)
    alpha = jax.random.uniform(ks[8], (B, 1), jnp.float32)

    gp = wgan_gp_loss(real, fake, v, a, params, alpha)
    gp = jax.block_until_ready(gp)

    gp_ref = reference_gp(real, fake, v, a, params, alpha)
    assert abs(float(gp) - float(gp_ref)) <= 1e-3 + 2e-2 * abs(float(gp_ref)), (
        float(gp), float(gp_ref))

    print("KERNEL_OK")
</pallas_src>

<mosaic_0001>
module attributes {stable_mosaic.version = 11 : i64} {
  func.func @_wgan_gp_kernel(%arg0: i32, %arg1: i32, %arg2: memref<16x1xf32, #tpu.memory_space<vmem>>, %arg3: memref<16x1024xf32, #tpu.memory_space<vmem>>, %arg4: memref<16x1024xf32, #tpu.memory_space<vmem>>, %arg5: memref<16x128xf32, #tpu.memory_space<vmem>>, %arg6: memref<1024x128xbf16, #tpu.memory_space<vmem>>, %arg7: memref<128x128xf32, #tpu.memory_space<vmem>>, %arg8: memref<1x128xf32, #tpu.memory_space<vmem>>, %arg9: memref<16x1xf32, #tpu.memory_space<vmem>>, %arg10: memref<16x128xf32, #tpu.memory_space<vmem>>) attributes {dimension_semantics = [#tpu.dimension_semantics<parallel>, #tpu.dimension_semantics<arbitrary>], iteration_bounds = array<i64: 1, 1>, scalar_prefetch = 0 : i64, scratch_operands = 1 : i64, tpu.core_type = #tpu.core_type<tc>, window_params = [{transform_indices = @transform_0, window_bounds = array<i64: 16, 1>}, {transform_indices = @transform_1, window_bounds = array<i64: 16, 1024>}, {transform_indices = @transform_2, window_bounds = array<i64: 16, 1024>}, {transform_indices = @transform_3, window_bounds = array<i64: 16, 128>}, {transform_indices = @transform_4, window_bounds = array<i64: 1024, 128>}, {pipeline_mode = #tpu.pipeline_mode<synchronous>, transform_indices = @transform_5, window_bounds = array<i64: 128, 128>}, {pipeline_mode = #tpu.pipeline_mode<synchronous>, transform_indices = @transform_6, window_bounds = array<i64: 1, 128>}, {transform_indices = @transform_7, window_bounds = array<i64: 16, 1>}]} {
    %c0_i32 = arith.constant 0 : i32
    %0 = arith.cmpi eq, %arg1, %c0_i32 : i32
    %1 = arith.extui %0 : i1 to i32
    %c0_i32_0 = arith.constant 0 : i32
    %2 = arith.cmpi ne, %1, %c0_i32_0 : i32
    scf.if %2 {
      %c0_14 = arith.constant 0 : index
      %c0_15 = arith.constant 0 : index
      %21 = vector.load %arg5[%c0_14, %c0_15] : memref<16x128xf32, #tpu.memory_space<vmem>>, vector<16x128xf32>
      %c0_16 = arith.constant 0 : index
      %c0_17 = arith.constant 0 : index
      %22 = vector.load %arg10[%c0_16, %c0_17] : memref<16x128xf32, #tpu.memory_space<vmem>>, vector<16x128xf32>
      tpu.vector_store %arg10[%c0_16, %c0_17], %21 {strides = array<i32>} : memref<16x128xf32, #tpu.memory_space<vmem>>, vector<16x128xf32>,
    } else {
    }
    %c0 = arith.constant 0 : index
    %c0_1 = arith.constant 0 : index
    %3 = vector.load %arg3[%c0, %c0_1] : memref<16x1024xf32, #tpu.memory_space<vmem>>, vector<16x1024xf32>
    %4 = arith.truncf %3 : vector<16x1024xf32> to vector<16x1024xbf16>
    %c0_2 = arith.constant 0 : index
    %c0_3 = arith.constant 0 : index
    %5 = vector.load %arg4[%c0_2, %c0_3] : memref<16x1024xf32, #tpu.memory_space<vmem>>, vector<16x1024xf32>
    %6 = arith.truncf %5 : vector<16x1024xf32> to vector<16x1024xbf16>
    %c0_4 = arith.constant 0 : index
    %c0_5 = arith.constant 0 : index
    %7 = vector.load %arg2[%c0_4, %c0_5] : memref<16x1xf32, #tpu.memory_space<vmem>>, vector<16x1xf32>
    %8 = arith.truncf %7 : vector<16x1xf32> to vector<16x1xbf16>
    %9 = arith.subf %4, %6 : vector<16x1024xbf16>
    %10 = vector.broadcast %8 : vector<16x1xbf16> to vector<16x1024xbf16>
    %11 = arith.mulf %10, %9 : vector<16x1024xbf16>
    %12 = arith.addf %6, %11 : vector<16x1024xbf16>
    %c0_6 = arith.constant 0 : index
    %c0_7 = arith.constant 0 : index
    %13 = vector.load %arg10[%c0_6, %c0_7] : memref<16x128xf32, #tpu.memory_space<vmem>>, vector<16x128xf32>
    %c0_8 = arith.constant 0 : index
    %c0_9 = arith.constant 0 : index
    %14 = vector.load %arg6[%c0_8, %c0_9] : memref<1024x128xbf16, #tpu.memory_space<vmem>>, vector<1024x128xbf16>
    %cst = arith.constant dense<0.000000e+00> : vector<16x128xf32>
    %15 = tpu.matmul %12, %14, %cst {dimension_numbers = #tpu.dot_dimension_numbers<[1], [0], [0], [1], [0, 0, 1, 1], [], []>} : vector<16x1024xbf16>, vector<1024x128xbf16>, vector<16x128xf32> -> vector<16x128xf32>
    %16 = arith.addf %13, %15 : vector<16x128xf32>
    %c0_10 = arith.constant 0 : index
    %c0_11 = arith.constant 0 : index
    %17 = vector.load %arg10[%c0_10, %c0_11] : memref<16x128xf32, #tpu.memory_space<vmem>>, vector<16x128xf32>
    tpu.vector_store %arg10[%c0_10, %c0_11], %16 {strides = array<i32>} : memref<16x128xf32, #tpu.memory_space<vmem>>, vector<16x128xf32>,
    %c0_i32_12 = arith.constant 0 : i32
    %18 = arith.cmpi eq, %arg1, %c0_i32_12 : i32
    %19 = arith.extui %18 : i1 to i32
    %c0_i32_13 = arith.constant 0 : i32
    %20 = arith.cmpi ne, %19, %c0_i32_13 : i32
    scf.if %20 {
      %c0_14 = arith.constant 0 : index
      %c0_15 = arith.constant 0 : index
      %21 = vector.load %arg10[%c0_14, %c0_15] : memref<16x128xf32, #tpu.memory_space<vmem>>, vector<16x128xf32>
      %22 = math.tanh %21 : vector<16x128xf32>
      %23 = arith.mulf %22, %22 : vector<16x128xf32>
      %cst_16 = arith.constant 1.000000e+00 : f32
      %24 = vector.broadcast %cst_16 : f32 to vector<16x128xf32>
      %25 = arith.subf %24, %23 : vector<16x128xf32>
      %c0_17 = arith.constant 0 : index
      %c0_18 = arith.constant 0 : index
      %26 = vector.load %arg8[%c0_17, %c0_18] : memref<1x128xf32, #tpu.memory_space<vmem>>, vector<1x128xf32>
      %27 = vector.broadcast %26 : vector<1x128xf32> to vector<16x128xf32>
      %28 = arith.mulf %25, %27 : vector<16x128xf32>
      %c0_19 = arith.constant 0 : index
      %c0_20 = arith.constant 0 : index
      %29 = vector.load %arg7[%c0_19, %c0_20] : memref<128x128xf32, #tpu.memory_space<vmem>>, vector<128x128xf32>
      %cst_21 = arith.constant dense<0.000000e+00> : vector<16x128xf32>
      %30 = tpu.matmul %28, %29, %cst_21 {dimension_numbers = #tpu.dot_dimension_numbers<[1], [0], [0], [1], [0, 0, 1, 1], [], []>} : vector<16x128xf32>, vector<128x128xf32>, vector<16x128xf32> -> vector<16x128xf32>
      %31 = arith.mulf %30, %28 : vector<16x128xf32>
      %cst_22 = arith.constant dense<0.000000e+00> : vector<16xf32>
      %32 = vector.multi_reduction <add>, %31, %cst_22 [1] : vector<16x128xf32> to vector<16xf32>
      %33 = vector.shape_cast %32 : vector<16xf32> to vector<16x1xf32>
      %cst_23 = arith.constant 0.000000e+00 : f32
      %34 = vector.broadcast %cst_23 : f32 to vector<16x1xf32>
      %35 = arith.maximumf %33, %34 : vector<16x1xf32>
      %36 = math.sqrt %35 : vector<16x1xf32>
      %cst_24 = arith.constant 1.000000e+00 : f32
      %37 = vector.broadcast %cst_24 : f32 to vector<16x1xf32>
      %38 = arith.subf %36, %37 : vector<16x1xf32>
      %39 = arith.mulf %38, %38 : vector<16x1xf32>
      %c0_25 = arith.constant 0 : index
      %c0_26 = arith.constant 0 : index
      %40 = vector.load %arg9[%c0_25, %c0_26] : memref<16x1xf32, #tpu.memory_space<vmem>>, vector<16x1xf32>
      tpu.vector_store %arg9[%c0_25, %c0_26], %39 {strides = array<i32>} : memref<16x1xf32, #tpu.memory_space<vmem>>, vector<16x1xf32>,
    } else {
    }
    return
  }
  func.func @transform_0(%arg0: i32, %arg1: i32) -> (i32, i32) {
    %c0_i32 = arith.constant 0 : i32
    %c0_i32_0 = arith.constant 0 : i32
    return %arg0, %c0_i32 : i32, i32
  }
  func.func @transform_1(%arg0: i32, %arg1: i32) -> (i32, i32) {
    %c0_i32 = arith.constant 0 : i32
    return %arg0, %arg1 : i32, i32
  }
  func.func @transform_2(%arg0: i32, %arg1: i32) -> (i32, i32) {
    %c0_i32 = arith.constant 0 : i32
    return %arg0, %arg1 : i32, i32
  }
  func.func @transform_3(%arg0: i32, %arg1: i32) -> (i32, i32) {
    %c0_i32 = arith.constant 0 : i32
    %c0_i32_0 = arith.constant 0 : i32
    return %arg0, %c0_i32 : i32, i32
  }
  func.func @transform_4(%arg0: i32, %arg1: i32) -> (i32, i32) {
    %c0_i32 = arith.constant 0 : i32
    %c0_i32_0 = arith.constant 0 : i32
    return %arg1, %c0_i32 : i32, i32
  }
  func.func @transform_5(%arg0: i32, %arg1: i32) -> (i32, i32) {
    %c0_i32 = arith.constant 0 : i32
    %c0_i32_0 = arith.constant 0 : i32
    %c0_i32_1 = arith.constant 0 : i32
    return %c0_i32, %c0_i32_0 : i32, i32
  }
  func.func @transform_6(%arg0: i32, %arg1: i32) -> (i32, i32) {
    %c0_i32 = arith.constant 0 : i32
    %c0_i32_0 = arith.constant 0 : i32
    %c0_i32_1 = arith.constant 0 : i32
    return %c0_i32, %c0_i32_0 : i32, i32
  }
  func.func @transform_7(%arg0: i32, %arg1: i32) -> (i32, i32) {
    %c0_i32 = arith.constant 0 : i32
    %c0_i32_0 = arith.constant 0 : i32
    return %arg0, %c0_i32 : i32, i32
  }
}

</mosaic_0001>

<llo_original>
// kernel: tpu_custom_call.1
$region0: #{tpu_custom_call.1}
  #allocation0 [shape = 'u32[]', space=smem, size = 0x4, offset = 0x4, fixed_abs, tag = 'smem constant byte address 0x4 - core index']
  #allocation1 [shape = 'u32[144,128]{1,0:T(1,128)}', space=vmem, size = 0x12000, scoped, tag = 'internal scratch']
  #allocation2 [shape = 'f32[16,128]{1,0:T(8,128)}', space=vmem, size = 0x2000, scoped, tag = 'scratch operand']
  %s0 = inlined_call_operand.vmem [shape: f32[2,1], index: 0, kind: input, shape index: {}]
  %s1 = inlined_call_operand.hbm [shape: f32[2,1024], index: 1, kind: input, shape index: {}]
  %s2 = inlined_call_operand.hbm [shape: f32[2,1024], index: 2, kind: input, shape index: {}]
  %s3 = inlined_call_operand.vmem [shape: f32[2,128], index: 3, kind: input, shape index: {}]
  %s4 = inlined_call_operand.hbm [shape: bf16[1024,128], index: 4, kind: input, shape index: {}]
  %s5 = inlined_call_operand.hbm [shape: f32[128,128], index: 5, kind: input, shape index: {}]
  %s6 = inlined_call_operand.vmem [shape: f32[1,128], index: 6, kind: input, shape index: {}]
  %s7 = inlined_call_operand.vmem [shape: f32[2,1], index: 7, kind: output, shape index: {}]
  %s8 = sld [smem:[#allocation0]]
  $region92: #{tpu_custom_call.1} parent=0
    _
  %s10 = ssub.s32 1, %s8
  %s11 = scalar_select 0, %s10, %s8
  $region1: #{tpu_custom_call.1} parent=0
    #allocation3 [shape = 'u8[65536]{0}', space=vmem, size = 0x10000, scoped, tag = 'input window, operand 1, single buffered']
    #allocation4 [shape = 's32[1]{0}', space=sflag, size = 0x4, scoped, tag = 'scoped memory for tpu_custom_call.1']
    #allocation5 [shape = 'u8[65536]{0}', space=vmem, size = 0x10000, scoped, tag = 'input window, operand 2, single buffered']
    #allocation6 [shape = 's32[1]{0}', space=sflag, size = 0x4, scoped, tag = 'scoped memory for tpu_custom_call.1']
    #allocation7 [shape = 'u8[262144]{0}', space=vmem, size = 0x40000, scoped, tag = 'input window, operand 4, single buffered']
    #allocation8 [shape = 'u8[65536]{0}', space=vmem, size = 0x10000, scoped, tag = 'input window, operand 5, single buffered']
    #allocation9 [shape = 's32[1]{0}', space=sflag, size = 0x4, scoped, tag = 'scoped memory for tpu_custom_call.1']
    #allocation10 [shape = 'u8[8192]{0}', space=vmem, size = 0x2000, scoped, tag = 'output window, operand 0, single buffered']
    %12 = vsyncpa [#allocation4], 0
    %13 = vsyncpa [#allocation6], 0
    %14 = vsyncpa [#allocation9], 0
    // Predicated region
    $region2: #{tpu_custom_call.1} parent=1 // pred_check
      _
    $region3: #{tpu_custom_call.1} parent=1 // pred_check_branch
      %16 = sbr.rel (0) target = $region5
    $region4: #{tpu_custom_call.1} parent=1 // pred_region
      _
    $region5: #{tpu_custom_call.1} parent=1 // pred_fallthru
      _
    // Predicated region
    $region6: #{tpu_custom_call.1} parent=1 // pred_check
      _
    $region7: #{tpu_custom_call.1} parent=1 // pred_check_branch
      %18 = sbr.rel (0) target = $region9
    $region8: #{tpu_custom_call.1} parent=1 // pred_region
      %s20 = ssub.s32 2048, 256
      %21 = vsyncadd [#allocation4], %s20
      %s22 = sshll.u32 [#allocation3], 4
      %s23 = int_to_ptr.vmem [resolvable:$true] %s22
      %28 = dma.hbm_to_vmem [thread:$0]  %s1, 256, %s23, [#allocation4], 256, 256, 16
    $region9: #{tpu_custom_call.1} parent=1 // pred_fallthru
      _
    // Predicated region
    $region10: #{tpu_custom_call.1} parent=1 // pred_check
      _
    $region11: #{tpu_custom_call.1} parent=1 // pred_check_branch
      %30 = sbr.rel (0) target = $region13
    $region12: #{tpu_custom_call.1} parent=1 // pred_region
      %s32 = ssub.s32 2048, 256
      %33 = vsyncadd [#allocation6], %s32
      %s34 = sshll.u32 [#allocation5], 4
      %s35 = int_to_ptr.vmem [resolvable:$true] %s34
      %40 = dma.hbm_to_vmem [thread:$0]  %s2, 256, %s35, [#allocation6], 256, 256, 16
    $region13: #{tpu_custom_call.1} parent=1 // pred_fallthru
      _
    // Predicated region
    $region14: #{tpu_custom_call.1} parent=1 // pred_check
      _
    $region15: #{tpu_custom_call.1} parent=1 // pred_check_branch
      %42 = sbr.rel (0) target = $region17
    $region16: #{tpu_custom_call.1} parent=1 // pred_region
      _
    $region17: #{tpu_custom_call.1} parent=1 // pred_fallthru
      _
    // Predicated region
    $region18: #{tpu_custom_call.1} parent=1 // pred_check
      _
    $region19: #{tpu_custom_call.1} parent=1 // pred_check_branch
      %44 = sbr.rel (0) target = $region21
    $region20: #{tpu_custom_call.1} parent=1 // pred_region
      %s46 = ssub.s32 8192, 8192
      %47 = vsyncadd [#allocation6], %s46
      %s48 = sshll.u32 [#allocation7], 4
      %s49 = int_to_ptr.vmem [resolvable:$true] %s48
      %54 = dma.hbm_to_vmem [thread:$0]  %s4, 8192, %s49, [#allocation6], 64, 64, 4
    $region21: #{tpu_custom_call.1} parent=1 // pred_fallthru
      _
    // Predicated region
    $region22: #{tpu_custom_call.1} parent=1 // pred_check
      _
    $region23: #{tpu_custom_call.1} parent=1 // pred_check_branch
      %56 = sbr.rel (0) target = $region25
    $region24: #{tpu_custom_call.1} parent=1 // pred_region
      %s58 = ssub.s32 2048, 2048
      %59 = vsyncadd [#allocation9], %s58
      %s60 = sshll.u32 [#allocation8], 4
      %s61 = int_to_ptr.vmem [resolvable:$true] %s60
      %66 = dma.hbm_to_vmem [thread:$0]  %s5, 2048, %s61, [#allocation9], 128, 128, 8
    $region25: #{tpu_custom_call.1} parent=1 // pred_fallthru
      _
    // Predicated region
    $region26: #{tpu_custom_call.1} parent=1 // pred_check
      _
    $region27: #{tpu_custom_call.1} parent=1 // pred_check_branch
      %68 = sbr.rel (0) target = $region29
    $region28: #{tpu_custom_call.1} parent=1 // pred_region
      _
    $region29: #{tpu_custom_call.1} parent=1 // pred_fallthru
      _
    // Predicated region
    $region30: #{tpu_custom_call.1} parent=1 // pred_check
      _
    $region31: #{tpu_custom_call.1} parent=1 // pred_check_branch
      %70 = sbr.rel (0) target = $region33
    $region32: #{tpu_custom_call.1} parent=1 // pred_region
      %71 = dma.done [#allocation4], 2048
    $region33: #{tpu_custom_call.1} parent=1 // pred_fallthru
      _
    // Predicated region
    $region34: #{tpu_custom_call.1} parent=1 // pred_check
      _
    $region35: #{tpu_custom_call.1} parent=1 // pred_check_branch
      %73 = sbr.rel (0) target = $region37
    $region36: #{tpu_custom_call.1} parent=1 // pred_region
      %74 = dma.done [#allocation6], 2048
    $region37: #{tpu_custom_call.1} parent=1 // pred_fallthru
      _
    // Predicated region
    $region38: #{tpu_custom_call.1} parent=1 // pred_check
      _
    $region39: #{tpu_custom_call.1} parent=1 // pred_check_branch
      %76 = sbr.rel (0) target = $region41
    $region40: #{tpu_custom_call.1} parent=1 // pred_region
      %77 = dma.done [#allocation6], 8192
    $region41: #{tpu_custom_call.1} parent=1 // pred_fallthru
      _
    // Predicated region
    $region42: #{tpu_custom_call.1} parent=1 // pred_check
      _
    $region43: #{tpu_custom_call.1} parent=1 // pred_check_branch
      %79 = sbr.rel (0) target = $region45
    $region44: #{tpu_custom_call.1} parent=1 // pred_region
      %80 = dma.done [#allocation9], 2048
    $region45: #{tpu_custom_call.1} parent=1 // pred_fallthru
      _
    %p82 = scmp.eq.s32.totalorder 0, 0
    // Predicated region
    $region46: #{tpu_custom_call.1} parent=1 // pred_check
      %p83 = pneg %p82
    $region47: #{tpu_custom_call.1} parent=1 // pred_check_branch
      %85 = sbr.rel (%p83) target = $region49
    $region48: #{tpu_custom_call.1} parent=1 // pred_region
      %v86 = vld [vmem:[%s3] sm:$0xff]
      %v87 = vld [vmem:[%s3 + $0x8] sm:$0xff]
      %88 = vst [vmem:[#allocation2] sm:$0xff] %v86
      %89 = vst [vmem:[#allocation2 + $0x8] sm:$0xff] %v87
    $region49: #{tpu_custom_call.1} parent=1 // pred_fallthru
      _
    %v90 = vld [vmem:[#allocation3] sm:$0xff]
    %v91 = vld [vmem:[#allocation3 + $0x8] sm:$0xff]
    %v92 = vld [vmem:[#allocation3 + $0x10] sm:$0xff]
    %v93 = vld [vmem:[#allocation3 + $0x18] sm:$0xff]
    %v94 = vld [vmem:[#allocation3 + $0x20] sm:$0xff]
    %v95 = vld [vmem:[#allocation3 + $0x28] sm:$0xff]
    %v96 = vld [vmem:[#allocation3 + $0x30] sm:$0xff]
    %v97 = vld [vmem:[#allocation3 + $0x38] sm:$0xff]
    %v98 = vld [vmem:[#allocation3 + $0x40] sm:$0xff]
    %v99 = vld [vmem:[#allocation3 + $0x48] sm:$0xff]
    %v100 = vld [vmem:[#allocation3 + $0x50] sm:$0xff]
    %v101 = vld [vmem:[#allocation3 + $0x58] sm:$0xff]
    %v102 = vld [vmem:[#allocation3 + $0x60] sm:$0xff]
    %v103 = vld [vmem:[#allocation3 + $0x68] sm:$0xff]
    %v104 = vld [vmem:[#allocation3 + $0x70] sm:$0xff]
    %v105 = vld [vmem:[#allocation3 + $0x78] sm:$0xff]
    %v122 = vcombine.low %v90, %v92
    %v123 = vcombine.high %v90, %v92
    %v124 = vcombine.low %v94, %v96
    %v125 = vcombine.high %v94, %v96
    %v127 = vunpack.c.l.s4 1983009808
    %v128 = vunpack.c.0.s8 %v127
    %v129 = vlaneseq
    %v130 = vshrl.u32 %v129, 7
    %v131 = vsub.s32 %v128, %v130
    %v132 = vrot.slane %v122, %v131
    %v134 = vunpack.c.l.s4 1983009808
    %v135 = vunpack.c.0.s8 %v134
    %v136 = vlaneseq
    %v137 = vshrl.u32 %v136, 7
    %v138 = vsub.s32 %v135, %v137
    %v139 = vrot.slane %v123, %v138
    %v141 = vunpack.c.l.s4 1983009808
    %v142 = vunpack.c.0.s8 %v141
    %v143 = vlaneseq
    %v144 = vshrl.u32 %v143, 7
    %v145 = vsub.s32 %v142, %v144
    %v146 = vrot.slane %v124, %v145
    %v148 = vunpack.c.l.s4 1983009808
    %v149 = vunpack.c.0.s8 %v148
    %v150 = vlaneseq
    %v151 = vshrl.u32 %v150, 7
    %v152 = vsub.s32 %v149, %v151
    %v153 = vrot.slane %v125, %v152
    %v154 = vcombine.low %v132, %v146
    %v155 = vcombine.high %v132, %v146
    %v156 = vcombine.low %v139, %v153
    %v157 = vcombine.high %v139, %v153
    %v158 = vcombine.low %v91, %v93
    %v159 = vcombine.high %v91, %v93
    %v160 = vcombine.low %v95, %v97
    %v161 = vcombine.high %v95, %v97
    %v163 = vunpack.c.l.s4 1983009808
    %v164 = vunpack.c.0.s8 %v163
    %v165 = vlaneseq
    %v166 = vshrl.u32 %v165, 7
    %v167 = vsub.s32 %v164, %v166
    %v168 = vrot.slane %v158, %v167
    %v170 = vunpack.c.l.s4 1983009808
    %v171 = vunpack.c.0.s8 %v170
    %v172 = vlaneseq
    %v173 = vshrl.u32 %v172, 7
    %v174 = vsub.s32 %v171, %v173
    %v175 = vrot.slane %v159, %v174
    %v177 = vunpack.c.l.s4 1983009808
    %v178 = vunpack.c.0.s8 %v177
    %v179 = vlaneseq
    %v180 = vshrl.u32 %v179, 7
    %v181 = vsub.s32 %v178, %v180
    %v182 = vrot.slane %v160, %v181
    %v184 = vunpack.c.l.s4 1983009808
    %v185 = vunpack.c.0.s8 %v184
    %v186 = vlaneseq
    %v187 = vshrl.u32 %v186, 7
    %v188 = vsub.s32 %v185, %v187
    %v189 = vrot.slane %v161, %v188
    %v190 = vcombine.low %v168, %v182
    %v191 = vcombine.high %v168, %v182
    %v192 = vcombine.low %v175, %v189
    %v193 = vcombine.high %v175, %v189
    %v194 = vcombine.low %v98, %v100
    %v195 = vcombine.high %v98, %v100
    %v196 = vcombine.low %v102, %v104
    %v197 = vcombine.high %v102, %v104
    %v199 = vunpack.c.l.s4 1983009808
    %v200 = vunpack.c.0.s8 %v199
    %v201 = vlaneseq
    %v202 = vshrl.u32 %v201, 7
    %v203 = vsub.s32 %v200, %v202
    %v204 = vrot.slane %v194, %v203
    %v206 = vunpack.c.l.s4 1983009808
    %v207 = vunpack.c.0.s8 %v206
    %v208 = vlaneseq
    %v209 = vshrl.u32 %v208, 7
    %v210 = vsub.s32 %v207, %v209
    %v211 = vrot.slane %v195, %v210
    %v213 = vunpack.c.l.s4 1983009808
    %v214 = vunpack.c.0.s8 %v213
    %v215 = vlaneseq
    %v216 = vshrl.u32 %v215, 7
    %v217 = vsub.s32 %v214, %v216
    %v218 = vrot.slane %v196, %v217
    %v220 = vunpack.c.l.s4 1983009808
    %v221 = vunpack.c.0.s8 %v220
    %v222 = vlaneseq
    %v223 = vshrl.u32 %v222, 7
    %v224 = vsub.s32 %v221, %v223
    %v225 = vrot.slane %v197, %v224
    %v226 = vcombine.low %v204, %v218
    %v227 = vcombine.high %v204, %v218
    %v228 = vcombine.low %v211, %v225
    %v229 = vcombine.high %v211, %v225
    %v230 = vcombine.low %v99, %v101
    %v231 = vcombine.high %v99, %v101
    %v232 = vcombine.low %v103, %v105
    %v233 = vcombine.high %v103, %v105
    %v235 = vunpack.c.l.s4 1983009808
    %v236 = vunpack.c.0.s8 %v235
    %v237 = vlaneseq
    %v238 = vshrl.u32 %v237, 7
    %v239 = vsub.s32 %v236, %v238
    %v240 = vrot.slane %v230, %v239
    %v242 = vunpack.c.l.s4 1983009808
    %v243 = vunpack.c.0.s8 %v242
    %v244 = vlaneseq
    %v245 = vshrl.u32 %v244, 7
    %v246 = vsub.s32 %v243, %v245
    %v247 = vrot.slane %v231, %v246
    %v249 = vunpack.c.l.s4 1983009808
    %v250 = vunpack.c.0.s8 %v249
    %v251 = vlaneseq
    %v252 = vshrl.u32 %v251, 7
    %v253 = vsub.s32 %v250, %v252
    %v254 = vrot.slane %v232, %v253
    %v256 = vunpack.c.l.s4 1983009808
    %v257 = vunpack.c.0.s8 %v256
    %v258 = vlaneseq
    %v259 = vshrl.u32 %v258, 7
    %v260 = vsub.s32 %v257, %v259
    %v261 = vrot.slane %v233, %v260
    %v262 = vcombine.low %v240, %v254
    %v263 = vcombine.high %v240, %v254
    %v264 = vcombine.low %v247, %v261
    %v265 = vcombine.high %v247, %v261
    %v282 = vpack.c.bf16 %v226, %v154
    %v283 = vpack.c.bf16 %v227, %v155
    %v284 = vpack.c.bf16 %v228, %v156
    %v285 = vpack.c.bf16 %v229, %v157
    %v286 = vpack.c.bf16 %v262, %v190
    %v287 = vpack.c.bf16 %v263, %v191
    %v288 = vpack.c.bf16 %v264, %v192
    %v289 = vpack.c.bf16 %v265, %v193
    %v290 = vld [vmem:[#allocation5] sm:$0xff]
    %v291 = vld [vmem:[#allocation5 + $0x8] sm:$0xff]
    %v292 = vld [vmem:[#allocation5 + $0x10] sm:$0xff]
    %v293 = vld [vmem:[#allocation5 + $0x18] sm:$0xff]
    %v294 = vld [vmem:[#allocation5 + $0x20] sm:$0xff]
    %v295 = vld [vmem:[#allocation5 + $0x28] sm:$0xff]
    %v296 = vld [vmem:[#allocation5 + $0x30] sm:$0xff]
    %v297 = vld [vmem:[#allocation5 + $0x38] sm:$0xff]
    %v298 = vld [vmem:[#allocation5 + $0x40] sm:$0xff]
    %v299 = vld [vmem:[#allocation5 + $0x48] sm:$0xff]
    %v300 = vld [vmem:[#allocation5 + $0x50] sm:$0xff]
    %v301 = vld [vmem:[#allocation5 + $0x58] sm:$0xff]
    %v302 = vld [vmem:[#allocation5 + $0x60] sm:$0xff]
    %v303 = vld [vmem:[#allocation5 + $0x68] sm:$0xff]
    %v304 = vld [vmem:[#allocation5 + $0x70] sm:$0xff]
    %v305 = vld [vmem:[#allocation5 + $0x78] sm:$0xff]
    %v322 = vcombine.low %v290, %v292
    %v323 = vcombine.high %v290, %v292
    %v324 = vcombine.low %v294, %v296
    %v325 = vcombine.high %v294, %v296
    %v327 = vunpack.c.l.s4 1983009808
    %v328 = vunpack.c.0.s8 %v327
    %v329 = vlaneseq
    %v330 = vshrl.u32 %v329, 7
    %v331 = vsub.s32 %v328, %v330
    %v332 = vrot.slane %v322, %v331
    %v334 = vunpack.c.l.s4 1983009808
    %v335 = vunpack.c.0.s8 %v334
    %v336 = vlaneseq
    %v337 = vshrl.u32 %v336, 7
    %v338 = vsub.s32 %v335, %v337
    %v339 = vrot.slane %v323, %v338
    %v341 = vunpack.c.l.s4 1983009808
    %v342 = vunpack.c.0.s8 %v341
    %v343 = vlaneseq
    %v344 = vshrl.u32 %v343, 7
    %v345 = vsub.s32 %v342, %v344
    %v346 = vrot.slane %v324, %v345
    %v348 = vunpack.c.l.s4 1983009808
    %v349 = vunpack.c.0.s8 %v348
    %v350 = vlaneseq
    %v351 = vshrl.u32 %v350, 7
    %v352 = vsub.s32 %v349, %v351
    %v353 = vrot.slane %v325, %v352
    %v354 = vcombine.low %v332, %v346
    %v355 = vcombine.high %v332, %v346
    %v356 = vcombine.low %v339, %v353
    %v357 = vcombine.high %v339, %v353
    %v358 = vcombine.low %v291, %v293
    %v359 = vcombine.high %v291, %v293
    %v360 = vcombine.low %v295, %v297
    %v361 = vcombine.high %v295, %v297
    %v363 = vunpack.c.l.s4 1983009808
    %v364 = vunpack.c.0.s8 %v363
    %v365 = vlaneseq
    %v366 = vshrl.u32 %v365, 7
    %v367 = vsub.s32 %v364, %v366
    %v368 = vrot.slane %v358, %v367
    %v370 = vunpack.c.l.s4 1983009808
    %v371 = vunpack.c.0.s8 %v370
    %v372 = vlaneseq
    %v373 = vshrl.u32 %v372, 7
    %v374 = vsub.s32 %v371, %v373
    %v375 = vrot.slane %v359, %v374
    %v377 = vunpack.c.l.s4 1983009808
    %v378 = vunpack.c.0.s8 %v377
    %v379 = vlaneseq
    %v380 = vshrl.u32 %v379, 7
    %v381 = vsub.s32 %v378, %v380
    %v382 = vrot.slane %v360, %v381
    %v384 = vunpack.c.l.s4 1983009808
    %v385 = vunpack.c.0.s8 %v384
    %v386 = vlaneseq
    %v387 = vshrl.u32 %v386, 7
    %v388 = vsub.s32 %v385, %v387
    %v389 = vrot.slane %v361, %v388
    %v390 = vcombine.low %v368, %v382
    %v391 = vcombine.high %v368, %v382
    %v392 = vcombine.low %v375, %v389
    %v393 = vcombine.high %v375, %v389
    %v394 = vcombine.low %v298, %v300
    %v395 = vcombine.high %v298, %v300
    %v396 = vcombine.low %v302, %v304
    %v397 = vcombine.high %v302, %v304
    %v399 = vunpack.c.l.s4 1983009808
    %v400 = vunpack.c.0.s8 %v399
    %v401 = vlaneseq
    %v402 = vshrl.u32 %v401, 7
    %v403 = vsub.s32 %v400, %v402
    %v404 = vrot.slane %v394, %v403
    %v406 = vunpack.c.l.s4 1983009808
    %v407 = vunpack.c.0.s8 %v406
    %v408 = vlaneseq
    %v409 = vshrl.u32 %v408, 7
    %v410 = vsub.s32 %v407, %v409
    %v411 = vrot.slane %v395, %v410
    %v413 = vunpack.c.l.s4 1983009808
    %v414 = vunpack.c.0.s8 %v413
    %v415 = vlaneseq
    %v416 = vshrl.u32 %v415, 7
    %v417 = vsub.s32 %v414, %v416
    %v418 = vrot.slane %v396, %v417
    %v420 = vunpack.c.l.s4 1983009808
    %v421 = vunpack.c.0.s8 %v420
    %v422 = vlaneseq
    %v423 = vshrl.u32 %v422, 7
    %v424 = vsub.s32 %v421, %v423
    %v425 = vrot.slane %v397, %v424
    %v426 = vcombine.low %v404, %v418
    %v427 = vcombine.high %v404, %v418
    %v428 = vcombine.low %v411, %v425
    %v429 = vcombine.high %v411, %v425
    %v430 = vcombine.low %v299, %v301
    %v431 = vcombine.high %v299, %v301
    %v432 = vcombine.low %v303, %v305
    %v433 = vcombine.high %v303, %v305
    %v435 = vunpack.c.l.s4 1983009808
    %v436 = vunpack.c.0.s8 %v435
    %v437 = vlaneseq
    %v438 = vshrl.u32 %v437, 7
    %v439 = vsub.s32 %v436, %v438
    %v440 = vrot.slane %v430, %v439
    %v442 = vunpack.c.l.s4 1983009808
    %v443 = vunpack.c.0.s8 %v442
    %v444 = vlaneseq
    %v445 = vshrl.u32 %v444, 7
    %v446 = vsub.s32 %v443, %v445
    %v447 = vrot.slane %v431, %v446
    %v449 = vunpack.c.l.s4 1983009808
    %v450 = vunpack.c.0.s8 %v449
    %v451 = vlaneseq
    %v452 = vshrl.u32 %v451, 7
    %v453 = vsub.s32 %v450, %v452
    %v454 = vrot.slane %v432, %v453
    %v456 = vunpack.c.l.s4 1983009808
    %v457 = vunpack.c.0.s8 %v456
    %v458 = vlaneseq
    %v459 = vshrl.u32 %v458, 7
    %v460 = vsub.s32 %v457, %v459
    %v461 = vrot.slane %v433, %v460
    %v462 = vcombine.low %v440, %v454
    %v463 = vcombine.high %v440, %v454
    %v464 = vcombine.low %v447, %v461
    %v465 = vcombine.high %v447, %v461
    %v482 = vpack.c.bf16 %v426, %v354
    %v483 = vpack.c.bf16 %v427, %v355
    %v484 = vpack.c.bf16 %v428, %v356
    %v485 = vpack.c.bf16 %v429, %v357
    %v486 = vpack.c.bf16 %v462, %v390
    %v487 = vpack.c.bf16 %v463, %v391
    %v488 = vpack.c.bf16 %v464, %v392
    %v489 = vpack.c.bf16 %v465, %v393
    %v490 = vld [vmem:[%s0] sm:$0xff]
    %v491 = vld [vmem:[%s0 + $0x8] sm:$0xff]
    %v492 = vpack.c.bf16 %v491, %v490
    %v493 = vsub.bf16 %v282, %v482
    %v494 = vsub.bf16 %v283, %v483
    %v495 = vsub.bf16 %v284, %v484
    %v496 = vsub.bf16 %v285, %v485
    %v497 = vsub.bf16 %v286, %v486
    %v498 = vsub.bf16 %v287, %v487
    %v499 = vsub.bf16 %v288, %v488
    %v500 = vsub.bf16 %v289, %v489
    %502 = vset.pattern.permute.xlu0 0
    %503 = vperm.xlu0 %502, %v492
    %v504 = vpop.permute.xlu0 %503
    %v506 = vmul.bf16 %v504, %v493
    %v507 = vmul.bf16 %v504, %v494
    %v508 = vmul.bf16 %v504, %v495
    %v509 = vmul.bf16 %v504, %v496
    %v510 = vmul.bf16 %v504, %v497
    %v511 = vmul.bf16 %v504, %v498
    %v512 = vmul.bf16 %v504, %v499
    %v513 = vmul.bf16 %v504, %v500
    %v514 = vadd.bf16 %v482, %v506
    %v515 = vadd.bf16 %v483, %v507
    %v516 = vadd.bf16 %v484, %v508
    %v517 = vadd.bf16 %v485, %v509
    %v518 = vadd.bf16 %v486, %v510
    %v519 = vadd.bf16 %v487, %v511
    %v520 = vadd.bf16 %v488, %v512
    %v521 = vadd.bf16 %v489, %v513
    %v522 = vld [vmem:[#allocation2] sm:$0xff]
    %v523 = vld [vmem:[#allocation2 + $0x8] sm:$0xff]
    %v524 = vld [vmem:[#allocation7] sm:$0xf]
    %v525 = vld [vmem:[#allocation7 + $0x4] sm:$0xf]
    %v526 = vld [vmem:[#allocation7 + $0x8] sm:$0xf]
    %v527 = vld [vmem:[#allocation7 + $0xc] sm:$0xf]
    %v528 = vld [vmem:[#allocation7 + $0x10] sm:$0xf]
    %v529 = vld [vmem:[#allocation7 + $0x14] sm:$0xf]
    %v530 = vld [vmem:[#allocation7 + $0x18] sm:$0xf]
    %v531 = vld [vmem:[#allocation7 + $0x1c] sm:$0xf]
    %v532 = vld [vmem:[#allocation7 + $0x20] sm:$0xf]
    %v533 = vld [vmem:[#allocation7 + $0x24] sm:$0xf]
    %v534 = vld [vmem:[#allocation7 + $0x28] sm:$0xf]
    %v535 = vld [vmem:[#allocation7 + $0x2c] sm:$0xf]
    %v536 = vld [vmem:[#allocation7 + $0x30] sm:$0xf]
    %v537 = vld [vmem:[#allocation7 + $0x34] sm:$0xf]
    %v538 = vld [vmem:[#allocation7 + $0x38] sm:$0xf]
    %v539 = vld [vmem:[#allocation7 + $0x3c] sm:$0xf]
    %v540 = vld [vmem:[#allocation7 + $0x40] sm:$0xf]
    %v541 = vld [vmem:[#allocation7 + $0x44] sm:$0xf]
    %v542 = vld [vmem:[#allocation7 + $0x48] sm:$0xf]
    %v543 = vld [vmem:[#allocation7 + $0x4c] sm:$0xf]
    %v544 = vld [vmem:[#allocation7 + $0x50] sm:$0xf]
    %v545 = vld [vmem:[#allocation7 + $0x54] sm:$0xf]
    %v546 = vld [vmem:[#allocation7 + $0x58] sm:$0xf]
    %v547 = vld [vmem:[#allocation7 + $0x5c] sm:$0xf]
    %v548 = vld [vmem:[#allocation7 + $0x60] sm:$0xf]
    %v549 = vld [vmem:[#allocation7 + $0x64] sm:$0xf]
    %v550 = vld [vmem:[#allocation7 + $0x68] sm:$0xf]
    %v551 = vld [vmem:[#allocation7 + $0x6c] sm:$0xf]
    %v552 = vld [vmem:[#allocation7 + $0x70] sm:$0xf]
    %v553 = vld [vmem:[#allocation7 + $0x74] sm:$0xf]
    %v554 = vld [vmem:[#allocation7 + $0x78] sm:$0xf]
    %v555 = vld [vmem:[#allocation7 + $0x7c] sm:$0xf]
    %v556 = vld [vmem:[#allocation7 + $0x80] sm:$0xf]
    %v557 = vld [vmem:[#allocation7 + $0x84] sm:$0xf]
    %v558 = vld [vmem:[#allocation7 + $0x88] sm:$0xf]
    %v559 = vld [vmem:[#allocation7 + $0x8c] sm:$0xf]
    %v560 = vld [vmem:[#allocation7 + $0x90] sm:$0xf]
    %v561 = vld [vmem:[#allocation7 + $0x94] sm:$0xf]
    %v562 = vld [vmem:[#allocation7 + $0x98] sm:$0xf]
    %v563 = vld [vmem:[#allocation7 + $0x9c] sm:$0xf]
    %v564 = vld [vmem:[#allocation7 + $0xa0] sm:$0xf]
    %v565 = vld [vmem:[#allocation7 + $0xa4] sm:$0xf]
    %v566 = vld [vmem:[#allocation7 + $0xa8] sm:$0xf]
    %v567 = vld [vmem:[#allocation7 + $0xac] sm:$0xf]
    %v568 = vld [vmem:[#allocation7 + $0xb0] sm:$0xf]
    %v569 = vld [vmem:[#allocation7 + $0xb4] sm:$0xf]
    %v570 = vld [vmem:[#allocation7 + $0xb8] sm:$0xf]
    %v571 = vld [vmem:[#allocation7 + $0xbc] sm:$0xf]
    %v572 = vld [vmem:[#allocation7 + $0xc0] sm:$0xf]
    %v573 = vld [vmem:[#allocation7 + $0xc4] sm:$0xf]
    %v574 = vld [vmem:[#allocation7 + $0xc8] sm:$0xf]
    %v575 = vld [vmem:[#allocation7 + $0xcc] sm:$0xf]
    %v576 = vld [vmem:[#allocation7 + $0xd0] sm:$0xf]
    %v577 = vld [vmem:[#allocation7 + $0xd4] sm:$0xf]
    %v578 = vld [vmem:[#allocation7 + $0xd8] sm:$0xf]
    %v579 = vld [vmem:[#allocation7 + $0xdc] sm:$0xf]
    %v580 = vld [vmem:[#allocation7 + $0xe0] sm:$0xf]
    %v581 = vld [vmem:[#allocation7 + $0xe4] sm:$0xf]
    %v582 = vld [vmem:[#allocation7 + $0xe8] sm:$0xf]
    %v583 = vld [vmem:[#allocation7 + $0xec] sm:$0xf]
    %v584 = vld [vmem:[#allocation7 + $0xf0] sm:$0xf]
    %v585 = vld [vmem:[#allocation7 + $0xf4] sm:$0xf]
    %v586 = vld [vmem:[#allocation7 + $0xf8] sm:$0xf]
    %v587 = vld [vmem:[#allocation7 + $0xfc] sm:$0xf]
    %v588 = vld [vmem:[#allocation7 + $0x100] sm:$0xf]
    %v589 = vld [vmem:[#allocation7 + $0x104] sm:$0xf]
    %v590 = vld [vmem:[#allocation7 + $0x108] sm:$0xf]
    %v591 = vld [vmem:[#allocation7 + $0x10c] sm:$0xf]
    %v592 = vld [vmem:[#allocation7 + $0x110] sm:$0xf]
    %v593 = vld [vmem:[#allocation7 + $0x114] sm:$0xf]
    %v594 = vld [vmem:[#allocation7 + $0x118] sm:$0xf]
    %v595 = vld [vmem:[#allocation7 + $0x11c] sm:$0xf]
    %v596 = vld [vmem:[#allocation7 + $0x120] sm:$0xf]
    %v597 = vld [vmem:[#allocation7 + $0x124] sm:$0xf]
    %v598 = vld [vmem:[#allocation7 + $0x128] sm:$0xf]
    %v599 = vld [vmem:[#allocation7 + $0x12c] sm:$0xf]
    %v600 = vld [vmem:[#allocation7 + $0x130] sm:$0xf]
    %v601 = vld [vmem:[#allocation7 + $0x134] sm:$0xf]
    %v602 = vld [vmem:[#allocation7 + $0x138] sm:$0xf]
    %v603 = vld [vmem:[#allocation7 + $0x13c] sm:$0xf]
    %v604 = vld [vmem:[#allocation7 + $0x140] sm:$0xf]
    %v605 = vld [vmem:[#allocation7 + $0x144] sm:$0xf]
    %v606 = vld [vmem:[#allocation7 + $0x148] sm:$0xf]
    %v607 = vld [vmem:[#allocation7 + $0x14c] sm:$0xf]
    %v608 = vld [vmem:[#allocation7 + $0x150] sm:$0xf]
    %v609 = vld [vmem:[#allocation7 + $0x154] sm:$0xf]
    %v610 = vld [vmem:[#allocation7 + $0x158] sm:$0xf]
    %v611 = vld [vmem:[#allocation7 + $0x15c] sm:$0xf]
    %v612 = vld [vmem:[#allocation7 + $0x160] sm:$0xf]
    %v613 = vld [vmem:[#allocation7 + $0x164] sm:$0xf]
    %v614 = vld [vmem:[#allocation7 + $0x168] sm:$0xf]
    %v615 = vld [vmem:[#allocation7 + $0x16c] sm:$0xf]
    %v616 = vld [vmem:[#allocation7 + $0x170] sm:$0xf]
    %v617 = vld [vmem:[#allocation7 + $0x174] sm:$0xf]
    %v618 = vld [vmem:[#allocation7 + $0x178] sm:$0xf]
    %v619 = vld [vmem:[#allocation7 + $0x17c] sm:$0xf]
    %v620 = vld [vmem:[#allocation7 + $0x180] sm:$0xf]
    %v621 = vld [vmem:[#allocation7 + $0x184] sm:$0xf]
    %v622 = vld [vmem:[#allocation7 + $0x188] sm:$0xf]
    %v623 = vld [vmem:[#allocation7 + $0x18c] sm:$0xf]
    %v624 = vld [vmem:[#allocation7 + $0x190] sm:$0xf]
    %v625 = vld [vmem:[#allocation7 + $0x194] sm:$0xf]
    %v626 = vld [vmem:[#allocation7 + $0x198] sm:$0xf]
    %v627 = vld [vmem:[#allocation7 + $0x19c] sm:$0xf]
    %v628 = vld [vmem:[#allocation7 + $0x1a0] sm:$0xf]
    %v629 = vld [vmem:[#allocation7 + $0x1a4] sm:$0xf]
    %v630 = vld [vmem:[#allocation7 + $0x1a8] sm:$0xf]
    %v631 = vld [vmem:[#allocation7 + $0x1ac] sm:$0xf]
    %v632 = vld [vmem:[#allocation7 + $0x1b0] sm:$0xf]
    %v633 = vld [vmem:[#allocation7 + $0x1b4] sm:$0xf]
    %v634 = vld [vmem:[#allocation7 + $0x1b8] sm:$0xf]
    %v635 = vld [vmem:[#allocation7 + $0x1bc] sm:$0xf]
    %v636 = vld [vmem:[#allocation7 + $0x1c0] sm:$0xf]
    %v637 = vld [vmem:[#allocation7 + $0x1c4] sm:$0xf]
    %v638 = vld [vmem:[#allocation7 + $0x1c8] sm:$0xf]
    %v639 = vld [vmem:[#allocation7 + $0x1cc] sm:$0xf]
    %v640 = vld [vmem:[#allocation7 + $0x1d0] sm:$0xf]
    %v641 = vld [vmem:[#allocation7 + $0x1d4] sm:$0xf]
    %v642 = vld [vmem:[#allocation7 + $0x1d8] sm:$0xf]
    %v643 = vld [vmem:[#allocation7 + $0x1dc] sm:$0xf]
    %v644 = vld [vmem:[#allocation7 + $0x1e0] sm:$0xf]
    %v645 = vld [vmem:[#allocation7 + $0x1e4] sm:$0xf]
    %v646 = vld [vmem:[#allocation7 + $0x1e8] sm:$0xf]
    %v647 = vld [vmem:[#allocation7 + $0x1ec] sm:$0xf]
    %v648 = vld [vmem:[#allocation7 + $0x1f0] sm:$0xf]
    %v649 = vld [vmem:[#allocation7 + $0x1f4] sm:$0xf]
    %v650 = vld [vmem:[#allocation7 + $0x1f8] sm:$0xf]
    %v651 = vld [vmem:[#allocation7 + $0x1fc] sm:$0xf]
    %v780 = vunpack.c.l.b16 %v524
    %v781 = vunpack.c.l.b16 %v525
    %v782 = vunpack.c.l.b16 %v526
    %v783 = vunpack.c.l.b16 %v527
    %v784 = vunpack.c.l.b16 %v528
    %v785 = vunpack.c.l.b16 %v529
    %v786 = vunpack.c.l.b16 %v530
    %v787 = vunpack.c.l.b16 %v531
    %v788 = vunpack.c.l.b16 %v532
    %v789 = vunpack.c.l.b16 %v533
    %v790 = vunpack.c.l.b16 %v534
    %v791 = vunpack.c.l.b16 %v535
    %v792 = vunpack.c.l.b16 %v536
    %v793 = vunpack.c.l.b16 %v537
    %v794 = vunpack.c.l.b16 %v538
    %v795 = vunpack.c.l.b16 %v539
    %v796 = vunpack.c.l.b16 %v540
    %v797 = vunpack.c.l.b16 %v541
    %v798 = vunpack.c.l.b16 %v542
    %v799 = vunpack.c.l.b16 %v543
    %v800 = vunpack.c.l.b16 %v544
    %v801 = vunpack.c.l.b16 %v545
    %v802 = vunpack.c.l.b16 %v546
    %v803 = vunpack.c.l.b16 %v547
    %v804 = vunpack.c.l.b16 %v548
    %v805 = vunpack.c.l.b16 %v549
    %v806 = vunpack.c.l.b16 %v550
    %v807 = vunpack.c.l.b16 %v551
    %v808 = vunpack.c.l.b16 %v552
    %v809 = vunpack.c.l.b16 %v553
    %v810 = vunpack.c.l.b16 %v554
    %v811 = vunpack.c.l.b16 %v555
    %v812 = vunpack.c.l.b16 %v556
    %v813 = vunpack.c.l.b16 %v557
    %v814 = vunpack.c.l.b16 %v558
    %v815 = vunpack.c.l.b16 %v559
    %v816 = vunpack.c.l.b16 %v560
    %v817 = vunpack.c.l.b16 %v561
    %v818 = vunpack.c.l.b16 %v562
    %v819 = vunpack.c.l.b16 %v563
    %v820 = vunpack.c.l.b16 %v564
    %v821 = vunpack.c.l.b16 %v565
    %v822 = vunpack.c.l.b16 %v566
    %v823 = vunpack.c.l.b16 %v567
    %v824 = vunpack.c.l.b16 %v568
    %v825 = vunpack.c.l.b16 %v569
    %v826 = vunpack.c.l.b16 %v570
    %v827 = vunpack.c.l.b16 %v571
    %v828 = vunpack.c.l.b16 %v572
    %v829 = vunpack.c.l.b16 %v573
    %v830 = vunpack.c.l.b16 %v574
    %v831 = vunpack.c.l.b16 %v575
    %v832 = vunpack.c.l.b16 %v576
    %v833 = vunpack.c.l.b16 %v577
    %v834 = vunpack.c.l.b16 %v578
    %v835 = vunpack.c.l.b16 %v579
    %v836 = vunpack.c.l.b16 %v580
    %v837 = vunpack.c.l.b16 %v581
    %v838 = vunpack.c.l.b16 %v582
    %v839 = vunpack.c.l.b16 %v583
    %v840 = vunpack.c.l.b16 %v584
    %v841 = vunpack.c.l.b16 %v585
    %v842 = vunpack.c.l.b16 %v586
    %v843 = vunpack.c.l.b16 %v587
    %v844 = vunpack.c.l.b16 %v588
    %v845 = vunpack.c.l.b16 %v589
    %v846 = vunpack.c.l.b16 %v590
    %v847 = vunpack.c.l.b16 %v591
    %v848 = vunpack.c.l.b16 %v592
    %v849 = vunpack.c.l.b16 %v593
    %v850 = vunpack.c.l.b16 %v594
    %v851 = vunpack.c.l.b16 %v595
    %v852 = vunpack.c.l.b16 %v596
    %v853 = vunpack.c.l.b16 %v597
    %v854 = vunpack.c.l.b16 %v598
    %v855 = vunpack.c.l.b16 %v599
    %v856 = vunpack.c.l.b16 %v600
    %v857 = vunpack.c.l.b16 %v601
    %v858 = vunpack.c.l.b16 %v602
    %v859 = vunpack.c.l.b16 %v603
    %v860 = vunpack.c.l.b16 %v604
    %v861 = vunpack.c.l.b16 %v605
    %v862 = vunpack.c.l.b16 %v606
    %v863 = vunpack.c.l.b16 %v607
    %v864 = vunpack.c.l.b16 %v608
    %v865 = vunpack.c.l.b16 %v609
    %v866 = vunpack.c.l.b16 %v610
    %v867 = vunpack.c.l.b16 %v611
    %v868 = vunpack.c.l.b16 %v612
    %v869 = vunpack.c.l.b16 %v613
    %v870 = vunpack.c.l.b16 %v614
    %v871 = vunpack.c.l.b16 %v615
    %v872 = vunpack.c.l.b16 %v616
    %v873 = vunpack.c.l.b16 %v617
    %v874 = vunpack.c.l.b16 %v618
    %v875 = vunpack.c.l.b16 %v619
    %v876 = vunpack.c.l.b16 %v620
    %v877 = vunpack.c.l.b16 %v621
    %v878 = vunpack.c.l.b16 %v622
    %v879 = vunpack.c.l.b16 %v623
    %v880 = vunpack.c.l.b16 %v624
    %v881 = vunpack.c.l.b16 %v625
    %v882 = vunpack.c.l.b16 %v626
    %v883 = vunpack.c.l.b16 %v627
    %v884 = vunpack.c.l.b16 %v628
    %v885 = vunpack.c.l.b16 %v629
    %v886 = vunpack.c.l.b16 %v630
    %v887 = vunpack.c.l.b16 %v631
    %v888 = vunpack.c.l.b16 %v632
    %v889 = vunpack.c.l.b16 %v633
    %v890 = vunpack.c.l.b16 %v634
    %v891 = vunpack.c.l.b16 %v635
    %v892 = vunpack.c.l.b16 %v636
    %v893 = vunpack.c.l.b16 %v637
    %v894 = vunpack.c.l.b16 %v638
    %v895 = vunpack.c.l.b16 %v639
    %v896 = vunpack.c.l.b16 %v640
    %v897 = vunpack.c.l.b16 %v641
    %v898 = vunpack.c.l.b16 %v642
    %v899 = vunpack.c.l.b16 %v643
    %v900 = vunpack.c.l.b16 %v644
    %v901 = vunpack.c.l.b16 %v645
    %v902 = vunpack.c.l.b16 %v646
    %v903 = vunpack.c.l.b16 %v647
    %v904 = vunpack.c.l.b16 %v648
    %v905 = vunpack.c.l.b16 %v649
    %v906 = vunpack.c.l.b16 %v650
    %v907 = vunpack.c.l.b16 %v651
    %v908 = vpack.c.b16 %v781, %v780
    %v909 = vpack.c.b16 %v783, %v782
    %v910 = vpack.c.b16 %v785, %v784
    %v911 = vpack.c.b16 %v787, %v786
    %v912 = vpack.c.b16 %v789, %v788
    %v913 = vpack.c.b16 %v791, %v790
    %v914 = vpack.c.b16 %v793, %v792
    %v915 = vpack.c.b16 %v795, %v794
    %v916 = vpack.c.b16 %v797, %v796
    %v917 = vpack.c.b16 %v799, %v798
    %v918 = vpack.c.b16 %v801, %v800
    %v919 = vpack.c.b16 %v803, %v802
    %v920 = vpack.c.b16 %v805, %v804
    %v921 = vpack.c.b16 %v807, %v806
    %v922 = vpack.c.b16 %v809, %v808
    %v923 = vpack.c.b16 %v811, %v810
    %v924 = vpack.c.b16 %v813, %v812
    %v925 = vpack.c.b16 %v815, %v814
    %v926 = vpack.c.b16 %v817, %v816
    %v927 = vpack.c.b16 %v819, %v818
    %v928 = vpack.c.b16 %v821, %v820
    %v929 = vpack.c.b16 %v823, %v822
    %v930 = vpack.c.b16 %v825, %v824
    %v931 = vpack.c.b16 %v827, %v826
    %v932 = vpack.c.b16 %v829, %v828
    %v933 = vpack.c.b16 %v831, %v830
    %v934 = vpack.c.b16 %v833, %v832
    %v935 = vpack.c.b16 %v835, %v834
    %v936 = vpack.c.b16 %v837, %v836
    %v937 = vpack.c.b16 %v839, %v838
    %v938 = vpack.c.b16 %v841, %v840
    %v939 = vpack.c.b16 %v843, %v842
    %v940 = vpack.c.b16 %v845, %v844
    %v941 = vpack.c.b16 %v847, %v846
    %v942 = vpack.c.b16 %v849, %v848
    %v943 = vpack.c.b16 %v851, %v850
    %v944 = vpack.c.b16 %v853, %v852
    %v945 = vpack.c.b16 %v855, %v854
    %v946 = vpack.c.b16 %v857, %v856
    %v947 = vpack.c.b16 %v859, %v858
    %v948 = vpack.c.b16 %v861, %v860
    %v949 = vpack.c.b16 %v863, %v862
    %v950 = vpack.c.b16 %v865, %v864
    %v951 = vpack.c.b16 %v867, %v866
    %v952 = vpack.c.b16 %v869, %v868
    %v953 = vpack.c.b16 %v871, %v870
    %v954 = vpack.c.b16 %v873, %v872
    %v955 = vpack.c.b16 %v875, %v874
    %v956 = vpack.c.b16 %v877, %v876
    %v957 = vpack.c.b16 %v879, %v878
    %v958 = vpack.c.b16 %v881, %v880
    %v959 = vpack.c.b16 %v883, %v882
    %v960 = vpack.c.b16 %v885, %v884
    %v961 = vpack.c.b16 %v887, %v886
    %v962 = vpack.c.b16 %v889, %v888
    %v963 = vpack.c.b16 %v891, %v890
    %v964 = vpack.c.b16 %v893, %v892
    %v965 = vpack.c.b16 %v895, %v894
    %v966 = vpack.c.b16 %v897, %v896
    %v967 = vpack.c.b16 %v899, %v898
    %v968 = vpack.c.b16 %v901, %v900
    %v969 = vpack.c.b16 %v903, %v902
    %v970 = vpack.c.b16 %v905, %v904
    %v971 = vpack.c.b16 %v907, %v906
    %1036 = vmatprep.subr.bf16.mxu0 0
    %1037 = vmatpush1.bf16.msra.mxu0 %v915
    %1038 = vmatprep.subr.bf16.mxu0 0
    %1039 = vmatpush1.bf16.msra.mxu0 %v914
    %1040 = vmatprep.subr.bf16.mxu0 0
    %1041 = vmatpush1.bf16.msra.mxu0 %v913
    %1042 = vmatprep.subr.bf16.mxu0 0
    %1043 = vmatpush1.bf16.msra.mxu0 %v912
    %1044 = vmatprep.subr.bf16.mxu0 0
    %1045 = vmatpush1.bf16.msra.mxu0 %v911
    %1046 = vmatprep.subr.bf16.mxu0 0
    %1047 = vmatpush1.bf16.msra.mxu0 %v910
    %1048 = vmatprep.subr.bf16.mxu0 0
    %1049 = vmatpush1.bf16.msra.mxu0 %v909
    %1050 = vmatprep.subr.bf16.mxu0 0
    %1051 = vmatpush1.bf16.msra.mxu0 %v908
    %1052 = vmatprep.subr.bf16.mxu0 0
    %1053 = vmatpush2.bf16.msra.mxu0 %v923
    %1054 = vmatprep.subr.bf16.mxu0 0
    %1055 = vmatpush2.bf16.msra.mxu0 %v922
    %1056 = vmatprep.subr.bf16.mxu0 0
    %1057 = vmatpush2.bf16.msra.mxu0 %v921
    %1058 = vmatprep.subr.bf16.mxu0 0
    %1059 = vmatpush2.bf16.msra.mxu0 %v920
    %1060 = vmatprep.subr.bf16.mxu0 0
    %1061 = vmatpush2.bf16.msra.mxu0 %v919
    %1062 = vmatprep.subr.bf16.mxu0 0
    %1063 = vmatpush2.bf16.msra.mxu0 %v918
    %1064 = vmatprep.subr.bf16.mxu0 0
    %1065 = vmatpush2.bf16.msra.mxu0 %v917
    %1066 = vmatprep.subr.bf16.mxu0 0
    %1067 = vmatpush2.bf16.msra.mxu0 %v916
    %1068 = vmatprep.mubr.bf16.mxu0 %v515
    %1069 = vmatmul.mubr.bf16.gmra.mxu0 %v514
    %v1070 = vpop.f32.mrf.mxu0
    %v1071 = vadd.f32 0.0, %v1070
    %v1072 = vpop.f32.mrf.mxu0
    %v1073 = vpop.f32.mrf.mxu0
    %v1074 = vadd.f32 0.0, %v1073
    %v1075 = vpop.f32.mrf.mxu0
    %1076 = vdwg.mxu0
    %1077 = vmatprep.subr.bf16.mxu0 0
    %1078 = vmatpush1.bf16.msra.mxu0 %v931
    %1079 = vmatprep.subr.bf16.mxu0 0
    %1080 = vmatpush1.bf16.msra.mxu0 %v930
    %1081 = vmatprep.subr.bf16.mxu0 0
    %1082 = vmatpush1.bf16.msra.mxu0 %v929
    %1083 = vmatprep.subr.bf16.mxu0 0
    %1084 = vmatpush1.bf16.msra.mxu0 %v928
    %1085 = vmatprep.subr.bf16.mxu0 0
    %1086 = vmatpush1.bf16.msra.mxu0 %v927
    %1087 = vmatprep.subr.bf16.mxu0 0
    %1088 = vmatpush1.bf16.msra.mxu0 %v926
    %1089 = vmatprep.subr.bf16.mxu0 0
    %1090 = vmatpush1.bf16.msra.mxu0 %v925
    %1091 = vmatprep.subr.bf16.mxu0 0
    %1092 = vmatpush1.bf16.msra.mxu0 %v924
    %1093 = vmatprep.subr.bf16.mxu0 0
    %1094 = vmatpush2.bf16.msra.mxu0 %v939
    %1095 = vmatprep.subr.bf16.mxu0 0
    %1096 = vmatpush2.bf16.msra.mxu0 %v938
    %1097 = vmatprep.subr.bf16.mxu0 0
    %1098 = vmatpush2.bf16.msra.mxu0 %v937
    %1099 = vmatprep.subr.bf16.mxu0 0
    %1100 = vmatpush2.bf16.msra.mxu0 %v936
    %1101 = vmatprep.subr.bf16.mxu0 0
    %1102 = vmatpush2.bf16.msra.mxu0 %v935
    %1103 = vmatprep.subr.bf16.mxu0 0
    %1104 = vmatpush2.bf16.msra.mxu0 %v934
    %1105 = vmatprep.subr.bf16.mxu0 0
    %1106 = vmatpush2.bf16.msra.mxu0 %v933
    %1107 = vmatprep.subr.bf16.mxu0 0
    %1108 = vmatpush2.bf16.msra.mxu0 %v932
    %1109 = vmatprep.mubr.bf16.mxu0 %v517
    %1110 = vmatmul.mubr.bf16.gmra.mxu0 %v516
    %v1111 = vpop.f32.mrf.mxu0
    %v1112 = vadd.f32 %v1071, %v1111
    %v1113 = vpop.f32.mrf.mxu0
    %v1114 = vpop.f32.mrf.mxu0
    %v1115 = vadd.f32 %v1074, %v1114
    %v1116 = vpop.f32.mrf.mxu0
    %1117 = vdwg.mxu0
    %1118 = vmatprep.subr.bf16.mxu0 0
    %1119 = vmatpush1.bf16.msra.mxu0 %v947
    %1120 = vmatprep.subr.bf16.mxu0 0
    %1121 = vmatpush1.bf16.msra.mxu0 %v946
    %1122 = vmatprep.subr.bf16.mxu0 0
    %1123 = vmatpush1.bf16.msra.mxu0 %v945
    %1124 = vmatprep.subr.bf16.mxu0 0
    %1125 = vmatpush1.bf16.msra.mxu0 %v944
    %1126 = vmatprep.subr.bf16.mxu0 0
    %1127 = vmatpush1.bf16.msra.mxu0 %v943
    %1128 = vmatprep.subr.bf16.mxu0 0
    %1129 = vmatpush1.bf16.msra.mxu0 %v942
    %1130 = vmatprep.subr.bf16.mxu0 0
    %1131 = vmatpush1.bf16.msra.mxu0 %v941
    %1132 = vmatprep.subr.bf16.mxu0 0
    %1133 = vmatpush1.bf16.msra.mxu0 %v940
    %1134 = vmatprep.subr.bf16.mxu0 0
    %1135 = vmatpush2.bf16.msra.mxu0 %v955
    %1136 = vmatprep.subr.bf16.mxu0 0
    %1137 = vmatpush2.bf16.msra.mxu0 %v954
    %1138 = vmatprep.subr.bf16.mxu0 0
    %1139 = vmatpush2.bf16.msra.mxu0 %v953
    %1140 = vmatprep.subr.bf16.mxu0 0
    %1141 = vmatpush2.bf16.msra.mxu0 %v952
    %1142 = vmatprep.subr.bf16.mxu0 0
    %1143 = vmatpush2.bf16.msra.mxu0 %v951
    %1144 = vmatprep.subr.bf16.mxu0 0
    %1145 = vmatpush2.bf16.msra.mxu0 %v950
    %1146 = vmatprep.subr.bf16.mxu0 0
    %1147 = vmatpush2.bf16.msra.mxu0 %v949
    %1148 = vmatprep.subr.bf16.mxu0 0
    %1149 = vmatpush2.bf16.msra.mxu0 %v948
    %1150 = vmatprep.mubr.bf16.mxu0 %v519
    %1151 = vmatmul.mubr.bf16.gmra.mxu0 %v518
    %v1152 = vpop.f32.mrf.mxu0
    %v1153 = vadd.f32 %v1112, %v1152
    %v1154 = vpop.f32.mrf.mxu0
    %v1155 = vpop.f32.mrf.mxu0
    %v1156 = vadd.f32 %v1115, %v1155
    %v1157 = vpop.f32.mrf.mxu0
    %1158 = vdwg.mxu0
    %1159 = vmatprep.subr.bf16.mxu0 0
    %1160 = vmatpush1.bf16.msra.mxu0 %v963
    %1161 = vmatprep.subr.bf16.mxu0 0
    %1162 = vmatpush1.bf16.msra.mxu0 %v962
    %1163 = vmatprep.subr.bf16.mxu0 0
    %1164 = vmatpush1.bf16.msra.mxu0 %v961
    %1165 = vmatprep.subr.bf16.mxu0 0
    %1166 = vmatpush1.bf16.msra.mxu0 %v960
    %1167 = vmatprep.subr.bf16.mxu0 0
    %1168 = vmatpush1.bf16.msra.mxu0 %v959
    %1169 = vmatprep.subr.bf16.mxu0 0
    %1170 = vmatpush1.bf16.msra.mxu0 %v958
    %1171 = vmatprep.subr.bf16.mxu0 0
    %1172 = vmatpush1.bf16.msra.mxu0 %v957
    %1173 = vmatprep.subr.bf16.mxu0 0
    %1174 = vmatpush1.bf16.msra.mxu0 %v956
    %1175 = vmatprep.subr.bf16.mxu0 0
    %1176 = vmatpush2.bf16.msra.mxu0 %v971
    %1177 = vmatprep.subr.bf16.mxu0 0
    %1178 = vmatpush2.bf16.msra.mxu0 %v970
    %1179 = vmatprep.subr.bf16.mxu0 0
    %1180 = vmatpush2.bf16.msra.mxu0 %v969
    %1181 = vmatprep.subr.bf16.mxu0 0
    %1182 = vmatpush2.bf16.msra.mxu0 %v968
    %1183 = vmatprep.subr.bf16.mxu0 0
    %1184 = vmatpush2.bf16.msra.mxu0 %v967
    %1185 = vmatprep.subr.bf16.mxu0 0
    %1186 = vmatpush2.bf16.msra.mxu0 %v966
    %1187 = vmatprep.subr.bf16.mxu0 0
    %1188 = vmatpush2.bf16.msra.mxu0 %v965
    %1189 = vmatprep.subr.bf16.mxu0 0
    %1190 = vmatpush2.bf16.msra.mxu0 %v964
    %1191 = vmatprep.mubr.bf16.mxu0 %v521
    %1192 = vmatmul.mubr.bf16.gmra.mxu0 %v520
    %v1193 = vpop.f32.mrf.mxu0
    %v1194 = vadd.f32 %v1153, %v1193
    %v1195 = vpop.f32.mrf.mxu0
    %v1196 = vpop.f32.mrf.mxu0
    %v1197 = vadd.f32 %v1156, %v1196
    %v1198 = vpop.f32.mrf.mxu0
    %1199 = vdwg.mxu0
    %v1200 = vadd.f32 %v522, %v1194
    %v1201 = vadd.f32 %v523, %v1197
    %1202 = vst [vmem:[#allocation2] sm:$0xff] %v1200
    %1203 = vst [vmem:[#allocation2 + $0x8] sm:$0xff] %v1201
    // Predicated region
    $region50: #{tpu_custom_call.1} parent=1 // pred_check
      %p1204 = pneg %p82
    $region51: #{tpu_custom_call.1} parent=1 // pred_check_branch
      %1206 = sbr.rel (%p1204) target = $region53
    $region52: #{tpu_custom_call.1} parent=1 // pred_region
      %v1207 = vld [vmem:[#allocation2] sm:$0xff]
      %v1208 = vld [vmem:[#allocation2 + $0x8] sm:$0xff]
      %v1209 = vtanh.pop %v1207
      %v1210 = vtanh.pop %v1208
      %v1211 = vmul.f32 %v1209, %v1209
      %v1212 = vmul.f32 %v1210, %v1210
      %v1213 = vsub.f32 1.0, %v1211
      %v1214 = vsub.f32 1.0, %v1212
      %v1215 = vld [vmem:[%s6] sm:$0x1]
      %v1217 = vlaneseq
      %v1218 = vshrl.u32 %v1217, 7
      %v1219 = vsub.s32 0, %v1218
      %v1220 = vrot.slane %v1215, %v1219
      %v1222 = vmul.f32 %v1213, %v1220
      %v1223 = vmul.f32 %v1214, %v1220
      %v1224 = vld [vmem:[#allocation8] sm:$0xff]
      %v1225 = vld [vmem:[#allocation8 + $0x8] sm:$0xff]
      %v1226 = vld [vmem:[#allocation8 + $0x10] sm:$0xff]
      %v1227 = vld [vmem:[#allocation8 + $0x18] sm:$0xff]
      %v1228 = vld [vmem:[#allocation8 + $0x20] sm:$0xff]
      %v1229 = vld [vmem:[#allocation8 + $0x28] sm:$0xff]
      %v1230 = vld [vmem:[#allocation8 + $0x30] sm:$0xff]
      %v1231 = vld [vmem:[#allocation8 + $0x38] sm:$0xff]
      %v1232 = vld [vmem:[#allocation8 + $0x40] sm:$0xff]
      %v1233 = vld [vmem:[#allocation8 + $0x48] sm:$0xff]
      %v1234 = vld [vmem:[#allocation8 + $0x50] sm:$0xff]
      %v1235 = vld [vmem:[#allocation8 + $0x58] sm:$0xff]
      %v1236 = vld [vmem:[#allocation8 + $0x60] sm:$0xff]
      %v1237 = vld [vmem:[#allocation8 + $0x68] sm:$0xff]
      %v1238 = vld [vmem:[#allocation8 + $0x70] sm:$0xff]
      %v1239 = vld [vmem:[#allocation8 + $0x78] sm:$0xff]
      %1240 = vmatprep.subr.mxu0 0.0
      %1241 = vmatpush1.msra.mxu0 %v1239
      %1242 = vmatprep.subr.mxu0 0.0
      %1243 = vmatpush1.msra.mxu0 %v1238
      %1244 = vmatprep.subr.mxu0 0.0
      %1245 = vmatpush1.msra.mxu0 %v1237
      %1246 = vmatprep.subr.mxu0 0.0
      %1247 = vmatpush1.msra.mxu0 %v1236
      %1248 = vmatprep.subr.mxu0 0.0
      %1249 = vmatpush1.msra.mxu0 %v1235
      %1250 = vmatprep.subr.mxu0 0.0
      %1251 = vmatpush1.msra.mxu0 %v1234
      %1252 = vmatprep.subr.mxu0 0.0
      %1253 = vmatpush1.msra.mxu0 %v1233
      %1254 = vmatprep.subr.mxu0 0.0
      %1255 = vmatpush1.msra.mxu0 %v1232
      %1256 = vmatprep.subr.mxu0 0.0
      %1257 = vmatpush1.msra.mxu0 %v1231
      %1258 = vmatprep.subr.mxu0 0.0
      %1259 = vmatpush1.msra.mxu0 %v1230
      %1260 = vmatprep.subr.mxu0 0.0
      %1261 = vmatpush1.msra.mxu0 %v1229
      %1262 = vmatprep.subr.mxu0 0.0
      %1263 = vmatpush1.msra.mxu0 %v1228
      %1264 = vmatprep.subr.mxu0 0.0
      %1265 = vmatpush1.msra.mxu0 %v1227
      %1266 = vmatprep.subr.mxu0 0.0
      %1267 = vmatpush1.msra.mxu0 %v1226
      %1268 = vmatprep.subr.mxu0 0.0
      %1269 = vmatpush1.msra.mxu0 %v1225
      %1270 = vmatprep.subr.mxu0 0.0
      %1271 = vmatpush1.msra.mxu0 %v1224
      %1272 = vmatprep.subr.mxu0 0.0
      %1273 = vmatpush2.msra.mxu0 0.0
      %1274 = vmatprep.subr.mxu0 0.0
      %1275 = vmatpush2.msra.mxu0 0.0
      %1276 = vmatprep.subr.mxu0 0.0
      %1277 = vmatpush2.msra.mxu0 0.0
      %1278 = vmatprep.subr.mxu0 0.0
      %1279 = vmatpush2.msra.mxu0 0.0
      %1280 = vmatprep.subr.mxu0 0.0
      %1281 = vmatpush2.msra.mxu0 0.0
      %1282 = vmatprep.subr.mxu0 0.0
      %1283 = vmatpush2.msra.mxu0 0.0
      %1284 = vmatprep.subr.mxu0 0.0
      %1285 = vmatpush2.msra.mxu0 0.0
      %1286 = vmatprep.subr.mxu0 0.0
      %1287 = vmatpush2.msra.mxu0 0.0
      %1288 = vmatprep.subr.mxu0 0.0
      %1289 = vmatpush2.msra.mxu0 0.0
      %1290 = vmatprep.subr.mxu0 0.0
      %1291 = vmatpush2.msra.mxu0 0.0
      %1292 = vmatprep.subr.mxu0 0.0
      %1293 = vmatpush2.msra.mxu0 0.0
      %1294 = vmatprep.subr.mxu0 0.0
      %1295 = vmatpush2.msra.mxu0 0.0
      %1296 = vmatprep.subr.mxu0 0.0
      %1297 = vmatpush2.msra.mxu0 0.0
      %1298 = vmatprep.subr.mxu0 0.0
      %1299 = vmatpush2.msra.mxu0 0.0
      %1300 = vmatprep.subr.mxu0 0.0
      %1301 = vmatpush2.msra.mxu0 0.0
      %1302 = vmatprep.subr.mxu0 0.0
      %1303 = vmatpush2.msra.mxu0 0.0
      %1304 = vmatprep.mubr.f32.mxu0 0.0
      %1305 = vmatmul.mubr.f32.gmra.mxu0 %v1222
      %v1306 = vpop.f32.mrf.mxu0
      %v1307 = vadd.f32 0.0, %v1306
      %v1308 = vpop.f32.mrf.mxu0
      %1309 = vmatprep.mubr.f32.mxu0 0.0
      %1310 = vmatmul.mubr.f32.gmra.mxu0 %v1223
      %v1311 = vpop.f32.mrf.mxu0
      %v1312 = vadd.f32 0.0, %v1311
      %v1313 = vpop.f32.mrf.mxu0
      %1314 = vdwg.mxu0
      %v1315 = vmul.f32 %v1307, %v1222
      %v1316 = vmul.f32 %v1312, %v1223
      %1317 = vadd.xlane.f32.xlu0 %v1315
      %v1318 = vpop.xlane.xlu0 %1317
      %1319 = vadd.xlane.f32.xlu0 %v1316
      %v1320 = vpop.xlane.xlu0 %1319
      %v1321 = vmax.f32 %v1318, 0.0
      %v1322 = vmax.f32 %v1320, 0.0
      %v1323 = vrsqrt.pop %v1321
      %v1324 = vmul.f32 %v1321, %v1323
      %vm1325 = vcmp.eq.f32.partialorder %v1321, inf
      %v1326 = vsel %vm1325, %v1321, %v1324
      %vm1327 = vcmp.eq.f32.partialorder %v1321, 0.0
      %v1328 = vand.u32 %v1321, 2147483648
      %v1329 = vsel %vm1327, %v1328, %v1326
      %v1330 = vrsqrt.pop %v1322
      %v1331 = vmul.f32 %v1322, %v1330
      %vm1332 = vcmp.eq.f32.partialorder %v1322, inf
      %v1333 = vsel %vm1332, %v1322, %v1331
      %vm1334 = vcmp.eq.f32.partialorder %v1322, 0.0
      %v1335 = vand.u32 %v1322, 2147483648
      %v1336 = vsel %vm1334, %v1335, %v1333
      %v1337 = vsub.f32 %v1329, 1.0
      %v1338 = vsub.f32 %v1336, 1.0
      %v1339 = vmul.f32 %v1337, %v1337
      %v1340 = vmul.f32 %v1338, %v1338
      %vm1341 = vcmask 7168
      %1342 = vst.msk [vmem:[#allocation10] sm:$0xff] %vm1341, %v1339
      %1343 = vst.msk [vmem:[#allocation10 + $0x8] sm:$0xff] %vm1341, %v1340
    $region53: #{tpu_custom_call.1} parent=1 // pred_fallthru
      _
    // Predicated region
    $region54: #{tpu_custom_call.1} parent=1 // pred_check
      _
    $region55: #{tpu_custom_call.1} parent=1 // pred_check_branch
      %1345 = sbr.rel (0) target = $region57
    $region56: #{tpu_custom_call.1} parent=1 // pred_region
      // Predicated region
      $region58: #{tpu_custom_call.1} parent=56 // pred_check
        _
      $region59: #{tpu_custom_call.1} parent=56 // pred_check_branch
        %1347 = sbr.rel (0) target = $region61
      $region60: #{tpu_custom_call.1} parent=56 // pred_region
        // Predicated region
        $region62: #{tpu_custom_call.1} parent=60 // pred_check
          _
        $region63: #{tpu_custom_call.1} parent=60 // pred_check_branch
          %1349 = sbr.rel target = $region65
        $region64: #{tpu_custom_call.1} parent=60 // pred_region
          // Predicated region
          $region77: #{tpu_custom_call.1} parent=64 // pred_check
            _
          $region78: #{tpu_custom_call.1} parent=64 // pred_check_branch
            %1365 = sbr.rel (0) target = $region80
          $region79: #{tpu_custom_call.1} parent=64 // pred_region
            %s1367 = ssub.s32 4, 1
            loop: start=0, step=1, limit=1
            $region81: #{tpu_custom_call.1} parent=79 // loop_pre_header
              _
            $region82: #{tpu_custom_call.1} parent=79 // loop_header
              %s1369 = sphi 0, %s1373
              %p1370 = scmp.ge.s32.totalorder %s1369, 1
              %s1374 = sphi [#allocation10], [#allocation10]
              %s1375 = sphi %s7, %s7
            $region83: #{tpu_custom_call.1} parent=79 // loop_header_branch
              %1372 = sbr.rel (%p1370) target = $region87
            $region84: #{tpu_custom_call.1} parent=79 // loop_body
              %v1376 = vld [vmem:[%s1374] sm:%s1367]
              %1377 = vst [vmem:[%s1375] sm:%s1367] %v1376
            $region85: #{tpu_custom_call.1} parent=79 // loop_footer
              %s1373 = sadd.s32 1, %s1369
            $region86: #{tpu_custom_call.1} parent=79 // loop_footer_branch
              %1368 = sbr.rel target = $region82
            $region87: #{tpu_custom_call.1} parent=79 // loop_exit
              _
          $region80: #{tpu_custom_call.1} parent=64 // pred_fallthru
            _
        $region65: #{tpu_custom_call.1} parent=60 // pred_fallthru
          _
        // Predicated region
        $region66: #{tpu_custom_call.1} parent=60 // pred_check
          _
        $region67: #{tpu_custom_call.1} parent=60 // pred_check_branch
          %1351 = sbr.rel (0) target = $region69
        $region68: #{tpu_custom_call.1} parent=60 // pred_region
          %s1353 = ssub.s32 4, 1
          loop: start=0, step=1, limit=1
          $region70: #{tpu_custom_call.1} parent=68 // loop_pre_header
            _
          $region71: #{tpu_custom_call.1} parent=68 // loop_header
            %s1355 = sphi 0, %s1359
            %p1356 = scmp.ge.s32.totalorder %s1355, 1
            %s1360 = sphi [#allocation10], [#allocation10]
            %s1361 = sphi %s7, %s7
          $region72: #{tpu_custom_call.1} parent=68 // loop_header_branch
            %1358 = sbr.rel (%p1356) target = $region76
          $region73: #{tpu_custom_call.1} parent=68 // loop_body
            %v1362 = vld [vmem:[%s1360] sm:%s1353]
            %1363 = vst [vmem:[%s1361] sm:%s1353] %v1362
          $region74: #{tpu_custom_call.1} parent=68 // loop_footer
            %s1359 = sadd.s32 1, %s1355
          $region75: #{tpu_custom_call.1} parent=68 // loop_footer_branch
            %1354 = sbr.rel target = $region71
          $region76: #{tpu_custom_call.1} parent=68 // loop_exit
            _
        $region69: #{tpu_custom_call.1} parent=60 // pred_fallthru
          _
      $region61: #{tpu_custom_call.1} parent=56 // pred_fallthru
        _
      %1378 = vnop
    $region57: #{tpu_custom_call.1} parent=1 // pred_fallthru
      _
    // Predicated region
    $region88: #{tpu_custom_call.1} parent=1 // pred_check
      _
    $region89: #{tpu_custom_call.1} parent=1 // pred_check_branch
      %1380 = sbr.rel (0) target = $region91
    $region90: #{tpu_custom_call.1} parent=1 // pred_region
      _
    $region91: #{tpu_custom_call.1} parent=1 // pred_fallthru
      _
    %1381 = vsyncpa [#allocation4], 1
    %1382 = vsyncpa [#allocation6], 1
    %1383 = vsyncpa [#allocation9], 1

</llo_original>
